<compile_context>
chip_gen: v7x
topology: tpu7x:2x2x1
jax: 0.10.0
libtpu: 0.0.40
codegen_flags: <defaults>
</compile_context>

<pallas_src>
import functools

import jax
import jax.numpy as jnp
from jax.experimental import pallas as pl
from jax.experimental.pallas import tpu as pltpu

LANE = 128
SUBLANE = 8
PASS_ROWS = 64  # rows processed per in-kernel pass (8 vregs per loaded f32 operand)


def _silog_sums_kernel(est_ref, gt_ref, d2_out, hub_out, *, delta, n_valid,
                       tile_rows, inner_tiles, needs_mask):
    p = pl.program_id(0)   # parallel axis (2 TensorCores on v7x)
    i = pl.program_id(1)   # arbitrary (reduction) axis

    # Output blocks are resident across the reduction axis -> accumulate in place.
    @pl.when(i == 0)
    def _():
        d2_out[...] = jnp.zeros_like(d2_out)
        hub_out[...] = jnp.zeros_like(hub_out)

    tile_idx = p * inner_tiles + i                 # logical (unclamped) tile index
    elem_base = tile_idx * (tile_rows * LANE)

    num_passes = tile_rows // PASS_ROWS            # static
    rem_rows = tile_rows % PASS_ROWS               # static, multiple of 8

    def make_idx(nrows):
        # Per-pass flat-offset iota (hoisted out of the fori_loop body).
        return (jax.lax.broadcasted_iota(jnp.int32, (nrows, LANE), 0) * LANE
                + jax.lax.broadcasted_iota(jnp.int32, (nrows, LANE), 1))

    def accumulate(row0, nrows, idx2d):
        est = jnp.maximum(est_ref[pl.ds(row0, nrows), :].astype(jnp.float32), 0.001)
        gt = jnp.maximum(gt_ref[pl.ds(row0, nrows), :].astype(jnp.float32), 0.001)

        # Huber loss (elementwise; summed here, mean taken in the wrapper).
        diff = est - gt
        adiff = jnp.abs(diff)
        hub = jnp.where(adiff < delta, 0.5 * diff * diff, delta * (adiff - 0.5 * delta))

        # Scale-invariant log difference; one EUP log instead of two.
        d = jnp.log(est / gt)
        d2 = d * d

        if needs_mask:
            keep = (elem_base + row0 * LANE + idx2d) < n_valid
            d2 = jnp.where(keep, d2, 0.0)
            hub = jnp.where(keep, hub, 0.0)

        # Vreg-shaped accumulation: fold (nrows,128) -> (8,128) with VPU adds only.
        d2_out[...] += d2.reshape(-1, SUBLANE, LANE).sum(axis=0)
        hub_out[...] += hub.reshape(-1, SUBLANE, LANE).sum(axis=0)

    if num_passes > 0:
        pass_idx = make_idx(PASS_ROWS) if needs_mask else None

        def body(s, carry):
            row0 = pl.multiple_of(s * PASS_ROWS, PASS_ROWS)
            accumulate(row0, PASS_ROWS, pass_idx)
            return carry

        jax.lax.fori_loop(0, num_passes, body, 0)

    if rem_rows > 0:
        rem_idx = make_idx(rem_rows) if needs_mask else None
        accumulate(num_passes * PASS_ROWS, rem_rows, rem_idx)


def silog_loss(depth_est, depth_gt, *, variance_focus, delta=1.0, tile_rows=2048):
    assert depth_est.shape == depth_gt.shape
    n = depth_est.size
    assert n > 0

    est = depth_est.reshape(-1)
    gt = depth_gt.reshape(-1)

    # Only a sub-128-element pad is ever materialized (needed so the flat array can be
    # viewed as (rows, 128)); everything else is handled by the in-kernel mask.
    pad = (-n) % LANE
    if pad:
        # TODO(synk): eliminating even this tiny pad would require 1-D blocks or manual DMA.
        est = jnp.concatenate([est, jnp.ones((pad,), est.dtype)])
        gt = jnp.concatenate([gt, jnp.ones((pad,), gt.dtype)])

    rows = (n + pad) // LANE
    rows8 = -(-rows // SUBLANE) * SUBLANE

    tile_rows = int(tile_rows)
    if rows8 <= tile_rows:
        tile_rows = rows8                                   # small input: one (padded) tile
    else:
        tile_rows = max(PASS_ROWS, (tile_rows // PASS_ROWS) * PASS_ROWS)

    num_tiles = -(-rows // tile_rows)
    split = 2 if num_tiles >= 2 else 1                      # v7x: 2 TensorCores
    inner_tiles = -(-num_tiles // split)
    needs_mask = (split * inner_tiles * tile_rows * LANE) != n

    est2 = est.reshape(rows, LANE)
    gt2 = gt.reshape(rows, LANE)

    def in_map(p, i):
        # Clamp so a fully-out-of-range tile (odd tile count with split=2) re-reads the
        # last valid tile; its contribution is zeroed by the in-kernel mask.
        return (jnp.minimum(p * inner_tiles + i, num_tiles - 1), 0)

    kernel = functools.partial(
        _silog_sums_kernel, delta=float(delta), n_valid=int(n),
        tile_rows=int(tile_rows), inner_tiles=int(inner_tiles),
        needs_mask=bool(needs_mask))

    d2_parts, hub_parts = pl.pallas_call(
        kernel,
        out_shape=(
            jax.ShapeDtypeStruct((split, SUBLANE, LANE), jnp.float32),
            jax.ShapeDtypeStruct((split, SUBLANE, LANE), jnp.float32),
        ),
        grid_spec=pltpu.PrefetchScalarGridSpec(
            num_scalar_prefetch=0,
            grid=(split, inner_tiles),
            in_specs=[
                pl.BlockSpec((tile_rows, LANE), in_map),
                pl.BlockSpec((tile_rows, LANE), in_map),
            ],
            out_specs=[
                pl.BlockSpec((None, SUBLANE, LANE), lambda p, i: (p, 0, 0)),
                pl.BlockSpec((None, SUBLANE, LANE), lambda p, i: (p, 0, 0)),
            ],
        ),
        compiler_params=pltpu.CompilerParams(
            dimension_semantics=("parallel", "arbitrary"),
        ),
    )(est2, gt2)

    inv_n = 1.0 / float(n)
    mean_d_squared = jnp.sum(d2_parts) * inv_n
    huber_mean = jnp.sum(hub_parts) * inv_n           # F.huber_loss(..., reduction='mean')
    out = mean_d_squared - variance_focus * huber_mean * huber_mean
    return jnp.sqrt(jnp.maximum(out, 0.0))


def _silog_loss_ref(depth_est, depth_gt, *, variance_focus, delta=1.0):
    est = jnp.maximum(depth_est.astype(jnp.float32), 0.001)
    gt = jnp.maximum(depth_gt.astype(jnp.float32), 0.001)
    diff = est - gt
    adiff = jnp.abs(diff)
    hub = jnp.where(adiff < delta, 0.5 * diff * diff, delta * (adiff - 0.5 * delta))
    huber_loss = hub.mean()
    d = jnp.log(est) - jnp.log(gt)
    out = (d ** 2).mean() - variance_focus * huber_loss ** 2
    return jnp.sqrt(jnp.maximum(out, 0.0))


if __name__ == "__main__":
    key = jax.random.PRNGKey(0)
    k1, k2, k3, k4, k5, k6 = jax.random.split(key, 6)

    variance_focus = 0.85
    delta = 1.0

    # Primary test: small NCHW depth maps (batch=2, channels=4, spatial=16x16).
    shape = (2, 4, 16, 16)
    depth_est = jax.random.uniform(k1, shape, jnp.float32, minval=0.0, maxval=10.0)
    depth_gt = jax.random.uniform(k2, shape, jnp.float32, minval=0.0, maxval=10.0)
    out = silog_loss(depth_est, depth_gt, variance_focus=variance_focus, delta=delta)
    out = jax.block_until_ready(out)
    ref = _silog_loss_ref(depth_est, depth_gt, variance_focus=variance_focus, delta=delta)
    assert jnp.allclose(out, ref, rtol=1e-5, atol=1e-5), (out, ref)

    # Second test: forces the multi-tile path, the 2-way parallel split, the clamped
    # (fully masked) trailing tile, and a partial last block (rows % tile_rows != 0).
    shape2 = (1, 5, 208, 128)   # 133120 elems -> 1040 rows of 128
    depth_est2 = jax.random.uniform(k3, shape2, jnp.float32, minval=0.0, maxval=10.0)
    depth_gt2 = jax.random.uniform(k4, shape2, jnp.float32, minval=0.0, maxval=10.0)
    out2 = silog_loss(depth_est2, depth_gt2, variance_focus=variance_focus, delta=delta,
                      tile_rows=256)
    out2 = jax.block_until_ready(out2)
    ref2 = _silog_loss_ref(depth_est2, depth_gt2, variance_focus=variance_focus, delta=delta)
    assert jnp.allclose(out2, ref2, rtol=1e-5, atol=1e-5), (out2, ref2)

    # Third test: ragged element count (n % 128 != 0) exercising the tiny-pad + mask path.
    shape3 = (3, 5, 7, 11)      # 1155 elems
    depth_est3 = jax.random.uniform(k5, shape3, jnp.float32, minval=0.0, maxval=10.0)
    depth_gt3 = jax.random.uniform(k6, shape3, jnp.float32, minval=0.0, maxval=10.0)
    out3 = silog_loss(depth_est3, depth_gt3, variance_focus=variance_focus, delta=delta)
    out3 = jax.block_until_ready(out3)
    ref3 = _silog_loss_ref(depth_est3, depth_gt3, variance_focus=variance_focus, delta=delta)
    assert jnp.allclose(out3, ref3, rtol=1e-5, atol=1e-5), (out3, ref3)

    print("KERNEL_OK")
</pallas_src>

<mosaic_0001>
module attributes {stable_mosaic.version = 11 : i64} {
  func.func @_silog_sums_kernel(%arg0: i32, %arg1: i32, %arg2: memref<16x128xf32, #tpu.memory_space<vmem>>, %arg3: memref<16x128xf32, #tpu.memory_space<vmem>>, %arg4: memref<1x8x128xf32, #tpu.memory_space<vmem>>, %arg5: memref<1x8x128xf32, #tpu.memory_space<vmem>>) attributes {dimension_semantics = [#tpu.dimension_semantics<parallel>, #tpu.dimension_semantics<arbitrary>], iteration_bounds = array<i64: 1, 1>, scalar_prefetch = 0 : i64, scratch_operands = 0 : i64, tpu.core_type = #tpu.core_type<tc>, window_params = [{transform_indices = @transform_0, window_bounds = array<i64: 16, 128>}, {transform_indices = @transform_1, window_bounds = array<i64: 16, 128>}, {transform_indices = @transform_2, window_bounds = array<i64: 1, 8, 128>}, {transform_indices = @transform_3, window_bounds = array<i64: 1, 8, 128>}]} {
    %c0_i32 = arith.constant 0 : i32
    %0 = arith.cmpi eq, %arg1, %c0_i32 : i32
    %1 = arith.extui %0 : i1 to i32
    %c0_i32_0 = arith.constant 0 : i32
    %2 = arith.cmpi ne, %1, %c0_i32_0 : i32
    scf.if %2 {
      %cst_23 = arith.constant 0.000000e+00 : f32
      %40 = vector.broadcast %cst_23 : f32 to vector<8x128xf32>
      %c0_24 = arith.constant 0 : index
      %c0_25 = arith.constant 0 : index
      %c0_26 = arith.constant 0 : index
      %41 = vector.load %arg4[%c0_24, %c0_25, %c0_26] : memref<1x8x128xf32, #tpu.memory_space<vmem>>, vector<1x8x128xf32>
      %42 = vector.shape_cast %41 : vector<1x8x128xf32> to vector<8x128xf32>
      %43 = vector.shape_cast %40 : vector<8x128xf32> to vector<1x8x128xf32>
      tpu.vector_store %arg4[%c0_24, %c0_25, %c0_26], %43 {strides = array<i32>} : memref<1x8x128xf32, #tpu.memory_space<vmem>>, vector<1x8x128xf32>,
      %cst_27 = arith.constant 0.000000e+00 : f32
      %44 = vector.broadcast %cst_27 : f32 to vector<8x128xf32>
      %c0_28 = arith.constant 0 : index
      %c0_29 = arith.constant 0 : index
      %c0_30 = arith.constant 0 : index
      %45 = vector.load %arg5[%c0_28, %c0_29, %c0_30] : memref<1x8x128xf32, #tpu.memory_space<vmem>>, vector<1x8x128xf32>
      %46 = vector.shape_cast %45 : vector<1x8x128xf32> to vector<8x128xf32>
      %47 = vector.shape_cast %44 : vector<8x128xf32> to vector<1x8x128xf32>
      tpu.vector_store %arg5[%c0_28, %c0_29, %c0_30], %47 {strides = array<i32>} : memref<1x8x128xf32, #tpu.memory_space<vmem>>, vector<1x8x128xf32>,
    } else {
    }
    %c0 = arith.constant 0 : index
    %c0_1 = arith.constant 0 : index
    %3 = vector.load %arg2[%c0, %c0_1] : memref<16x128xf32, #tpu.memory_space<vmem>>, vector<16x128xf32>
    %cst = arith.constant 1.000000e-03 : f32
    %4 = vector.broadcast %cst : f32 to vector<16x128xf32>
    %5 = arith.maximumf %3, %4 : vector<16x128xf32>
    %c0_2 = arith.constant 0 : index
    %c0_3 = arith.constant 0 : index
    %6 = vector.load %arg3[%c0_2, %c0_3] : memref<16x128xf32, #tpu.memory_space<vmem>>, vector<16x128xf32>
    %cst_4 = arith.constant 1.000000e-03 : f32
    %7 = vector.broadcast %cst_4 : f32 to vector<16x128xf32>
    %8 = arith.maximumf %6, %7 : vector<16x128xf32>
    %9 = arith.subf %5, %8 : vector<16x128xf32>
    %10 = math.absf %9 : vector<16x128xf32>
    %cst_5 = arith.constant 1.000000e+00 : f32
    %11 = vector.broadcast %cst_5 : f32 to vector<16x128xf32>
    %12 = arith.cmpf olt, %10, %11 : vector<16x128xf32>
    %cst_6 = arith.constant 5.000000e-01 : f32
    %13 = vector.broadcast %cst_6 : f32 to vector<16x128xf32>
    %14 = arith.mulf %13, %9 : vector<16x128xf32>
    %15 = arith.mulf %14, %9 : vector<16x128xf32>
    %cst_7 = arith.constant 5.000000e-01 : f32
    %16 = vector.broadcast %cst_7 : f32 to vector<16x128xf32>
    %17 = arith.subf %10, %16 : vector<16x128xf32>
    %cst_8 = arith.constant 1.000000e+00 : f32
    %18 = vector.broadcast %cst_8 : f32 to vector<16x128xf32>
    %19 = arith.mulf %18, %17 : vector<16x128xf32>
    %20 = arith.select %12, %15, %19 : vector<16x128xi1>, vector<16x128xf32>
    %21 = arith.divf %5, %8 : vector<16x128xf32>
    %22 = math.log %21 : vector<16x128xf32>
    %23 = arith.mulf %22, %22 : vector<16x128xf32>
    %c0_9 = arith.constant 0 : index
    %c0_10 = arith.constant 0 : index
    %c0_11 = arith.constant 0 : index
    %24 = vector.load %arg4[%c0_9, %c0_10, %c0_11] : memref<1x8x128xf32, #tpu.memory_space<vmem>>, vector<1x8x128xf32>
    %25 = vector.shape_cast %24 : vector<1x8x128xf32> to vector<8x128xf32>
    %26 = vector.shape_cast %23 : vector<16x128xf32> to vector<2x8x128xf32>
    %cst_12 = arith.constant dense<0.000000e+00> : vector<8x128xf32>
    %27 = vector.multi_reduction <add>, %26, %cst_12 [0] : vector<2x8x128xf32> to vector<8x128xf32>
    %28 = arith.addf %25, %27 : vector<8x128xf32>
    %c0_13 = arith.constant 0 : index
    %c0_14 = arith.constant 0 : index
    %c0_15 = arith.constant 0 : index
    %29 = vector.load %arg4[%c0_13, %c0_14, %c0_15] : memref<1x8x128xf32, #tpu.memory_space<vmem>>, vector<1x8x128xf32>
    %30 = vector.shape_cast %29 : vector<1x8x128xf32> to vector<8x128xf32>
    %31 = vector.shape_cast %28 : vector<8x128xf32> to vector<1x8x128xf32>
    tpu.vector_store %arg4[%c0_13, %c0_14, %c0_15], %31 {strides = array<i32>} : memref<1x8x128xf32, #tpu.memory_space<vmem>>, vector<1x8x128xf32>,
    %c0_16 = arith.constant 0 : index
    %c0_17 = arith.constant 0 : index
    %c0_18 = arith.constant 0 : index
    %32 = vector.load %arg5[%c0_16, %c0_17, %c0_18] : memref<1x8x128xf32, #tpu.memory_space<vmem>>, vector<1x8x128xf32>
    %33 = vector.shape_cast %32 : vector<1x8x128xf32> to vector<8x128xf32>
    %34 = vector.shape_cast %20 : vector<16x128xf32> to vector<2x8x128xf32>
    %cst_19 = arith.constant dense<0.000000e+00> : vector<8x128xf32>
    %35 = vector.multi_reduction <add>, %34, %cst_19 [0] : vector<2x8x128xf32> to vector<8x128xf32>
    %36 = arith.addf %33, %35 : vector<8x128xf32>
    %c0_20 = arith.constant 0 : index
    %c0_21 = arith.constant 0 : index
    %c0_22 = arith.constant 0 : index
    %37 = vector.load %arg5[%c0_20, %c0_21, %c0_22] : memref<1x8x128xf32, #tpu.memory_space<vmem>>, vector<1x8x128xf32>
    %38 = vector.shape_cast %37 : vector<1x8x128xf32> to vector<8x128xf32>
    %39 = vector.shape_cast %36 : vector<8x128xf32> to vector<1x8x128xf32>
    tpu.vector_store %arg5[%c0_20, %c0_21, %c0_22], %39 {strides = array<i32>} : memref<1x8x128xf32, #tpu.memory_space<vmem>>, vector<1x8x128xf32>,
    return
  }
  func.func @transform_0(%arg0: i32, %arg1: i32) -> (i32, i32) {
    %c1_i32 = arith.constant 1 : i32
    %0 = arith.muli %arg0, %c1_i32 : i32
    %1 = arith.addi %0, %arg1 : i32
    %c0_i32 = arith.constant 0 : i32
    %2 = arith.minsi %1, %c0_i32 : i32
    %c0_i32_0 = arith.constant 0 : i32
    %c0_i32_1 = arith.constant 0 : i32
    return %2, %c0_i32_0 : i32, i32
  }
  func.func @transform_1(%arg0: i32, %arg1: i32) -> (i32, i32) {
    %c1_i32 = arith.constant 1 : i32
    %0 = arith.muli %arg0, %c1_i32 : i32
    %1 = arith.addi %0, %arg1 : i32
    %c0_i32 = arith.constant 0 : i32
    %2 = arith.minsi %1, %c0_i32 : i32
    %c0_i32_0 = arith.constant 0 : i32
    %c0_i32_1 = arith.constant 0 : i32
    return %2, %c0_i32_0 : i32, i32
  }
  func.func @transform_2(%arg0: i32, %arg1: i32) -> (i32, i32, i32) {
    %c0_i32 = arith.constant 0 : i32
    %c0_i32_0 = arith.constant 0 : i32
    %c0_i32_1 = arith.constant 0 : i32
    return %arg0, %c0_i32, %c0_i32_0 : i32, i32, i32
  }
  func.func @transform_3(%arg0: i32, %arg1: i32) -> (i32, i32, i32) {
    %c0_i32 = arith.constant 0 : i32
    %c0_i32_0 = arith.constant 0 : i32
    %c0_i32_1 = arith.constant 0 : i32
    return %arg0, %c0_i32, %c0_i32_0 : i32, i32, i32
  }
}

</mosaic_0001>

<llo_original>
// kernel: tpu_custom_call.1
$region0: #{tpu_custom_call.1}
  #allocation0 [shape = 'u32[]', space=smem, size = 0x4, offset = 0x4, fixed_abs, tag = 'smem constant byte address 0x4 - core index']
  #allocation1 [shape = 'u32[144,128]{1,0:T(1,128)}', space=vmem, size = 0x12000, scoped, tag = 'internal scratch']
  %s0 = inlined_call_operand.hbm [shape: f32[16,128], index: 0, kind: input, shape index: {}]
  %s1 = inlined_call_operand.hbm [shape: f32[16,128], index: 1, kind: input, shape index: {}]
  %s2 = inlined_call_operand.hbm [shape: f32[1,8,128], index: 2, kind: output, shape index: {0}]
  %s3 = inlined_call_operand.hbm [shape: f32[1,8,128], index: 3, kind: output, shape index: {1}]
  %4 = xla_tuple %s2, %s3
  %s5 = sld [smem:[#allocation0]]
  $region38: #{tpu_custom_call.1} parent=0
    _
  %s7 = ssub.s32 1, %s5
  %s8 = scalar_select 0, %s7, %s5
  $region1: #{tpu_custom_call.1} parent=0
    #allocation2 [shape = 'u8[8192]{0}', space=vmem, size = 0x2000, scoped, tag = 'input window, operand 0, single buffered']
    #allocation3 [shape = 's32[1]{0}', space=sflag, size = 0x4, scoped, tag = 'scoped memory for tpu_custom_call.1']
    #allocation4 [shape = 's32[1]{0}', space=sflag, size = 0x4, scoped, tag = 'scoped memory for tpu_custom_call.1']
    #allocation5 [shape = 'u8[8192]{0}', space=vmem, size = 0x2000, scoped, tag = 'input window, operand 1, single buffered']
    #allocation6 [shape = 's32[1]{0}', space=sflag, size = 0x4, scoped, tag = 'scoped memory for tpu_custom_call.1']
    #allocation7 [shape = 'u8[4096]{0}', space=vmem, size = 0x1000, scoped, tag = 'output window, operand 0, single buffered']
    #allocation8 [shape = 'u8[4096]{0}', space=vmem, size = 0x1000, scoped, tag = 'output window, operand 1, single buffered']
    #allocation9 [shape = 's32[1]{0}', space=sflag, size = 0x4, scoped, tag = 'scoped memory for tpu_custom_call.1']
    %9 = vsyncpa [#allocation3], 0
    %10 = vsyncpa [#allocation6], 0
    %11 = vsyncpa [#allocation4], 0
    %12 = vsyncpa [#allocation9], 0
    // Predicated region
    $region2: #{tpu_custom_call.1} parent=1 // pred_check
      _
    $region3: #{tpu_custom_call.1} parent=1 // pred_check_branch
      %14 = sbr.rel (0) target = $region5
    $region4: #{tpu_custom_call.1} parent=1 // pred_region
      %s15 = sadd.s32 0, 0
      %p16 = scmp.lt.s32.totalorder %s15, 0
      %s17 = scalar_select %p16, %s15, 0
      %s18 = smul.u32 2, %s17
      %s20 = ssub.s32 256, 256
      %21 = vsyncadd [#allocation3], %s20
      %s22 = smul.addr %s18, 128
      %s23 = scalar_lea.hbm %s0, %s22
      %s24 = sshll.u32 [#allocation2], 4
      %s25 = int_to_ptr.vmem [resolvable:$true] %s24
      %30 = dma.hbm_to_vmem [thread:$0]  %s23, 256, %s25, [#allocation3], 128, 128, 8
    $region5: #{tpu_custom_call.1} parent=1 // pred_fallthru
      _
    // Predicated region
    $region6: #{tpu_custom_call.1} parent=1 // pred_check
      _
    $region7: #{tpu_custom_call.1} parent=1 // pred_check_branch
      %32 = sbr.rel (0) target = $region9
    $region8: #{tpu_custom_call.1} parent=1 // pred_region
      %s33 = sadd.s32 0, 0
      %p34 = scmp.lt.s32.totalorder %s33, 0
      %s35 = scalar_select %p34, %s33, 0
      %s36 = smul.u32 2, %s35
      %s38 = ssub.s32 256, 256
      %39 = vsyncadd [#allocation6], %s38
      %s40 = smul.addr %s36, 128
      %s41 = scalar_lea.hbm %s1, %s40
      %s42 = sshll.u32 [#allocation5], 4
      %s43 = int_to_ptr.vmem [resolvable:$true] %s42
      %48 = dma.hbm_to_vmem [thread:$0]  %s41, 256, %s43, [#allocation6], 128, 128, 8
    $region9: #{tpu_custom_call.1} parent=1 // pred_fallthru
      _
    // Predicated region
    $region10: #{tpu_custom_call.1} parent=1 // pred_check
      _
    $region11: #{tpu_custom_call.1} parent=1 // pred_check_branch
      %50 = sbr.rel (0) target = $region13
    $region12: #{tpu_custom_call.1} parent=1 // pred_region
      %51 = dma.done [#allocation3], 256
    $region13: #{tpu_custom_call.1} parent=1 // pred_fallthru
      _
    // Predicated region
    $region14: #{tpu_custom_call.1} parent=1 // pred_check
      _
    $region15: #{tpu_custom_call.1} parent=1 // pred_check_branch
      %53 = sbr.rel (0) target = $region17
    $region16: #{tpu_custom_call.1} parent=1 // pred_region
      %54 = dma.done [#allocation6], 256
    $region17: #{tpu_custom_call.1} parent=1 // pred_fallthru
      _
    %s55 = sadd.s32 0, 0
    %p56 = scmp.lt.s32.totalorder %s55, 0
    %s57 = scalar_select %p56, %s55, 0
    %s58 = smul.u32 2, %s57
    %s59 = sadd.s32 0, 0
    %p60 = scmp.lt.s32.totalorder %s59, 0
    %s61 = scalar_select %p60, %s59, 0
    %s62 = smul.u32 2, %s61
    %p63 = scmp.eq.s32.totalorder 0, 0
    // Predicated region
    $region18: #{tpu_custom_call.1} parent=1 // pred_check
      %p64 = pneg %p63
    $region19: #{tpu_custom_call.1} parent=1 // pred_check_branch
      %66 = sbr.rel (%p64) target = $region21
    $region20: #{tpu_custom_call.1} parent=1 // pred_region
      %67 = vst [vmem:[#allocation7] sm:$0xff] 0.0
      %68 = vst [vmem:[#allocation8] sm:$0xff] 0.0
    $region21: #{tpu_custom_call.1} parent=1 // pred_fallthru
      _
    %v69 = vld [vmem:[#allocation2] sm:$0xff]
    %v70 = vld [vmem:[#allocation2 + $0x8] sm:$0xff]
    %v71 = vmax.f32 %v69, 0.001
    %v72 = vmax.f32 %v70, 0.001
    %v73 = vld [vmem:[#allocation5] sm:$0xff]
    %v74 = vld [vmem:[#allocation5 + $0x8] sm:$0xff]
    %v75 = vmax.f32 %v73, 0.001
    %v76 = vmax.f32 %v74, 0.001
    %v77 = vsub.f32 %v71, %v75
    %v78 = vsub.f32 %v72, %v76
    %v79 = vand.u32 2147483647, %v77
    %v80 = vand.u32 2147483647, %v78
    %vm81 = vcmp.lt.f32.partialorder %v79, 1.0
    %vm82 = vcmp.lt.f32.partialorder %v80, 1.0
    %v83 = vmul.f32 %v77, 0.5
    %v84 = vmul.f32 %v78, 0.5
    %v85 = vmul.f32 %v83, %v77
    %v86 = vmul.f32 %v84, %v78
    %v87 = vsub.f32 %v79, 0.5
    %v88 = vsub.f32 %v80, 0.5
    %v89 = vsel %vm81, %v85, %v87
    %v90 = vsel %vm82, %v86, %v88
    %v91 = vrcp.pop %v75
    %v92 = vmul.f32 %v71, %v91
    %v93 = vrcp.pop %v76
    %v94 = vmul.f32 %v72, %v93
    %v95 = vlog2.pop %v92
    %v96 = vmul.f32 %v95, 0.6931472
    %v97 = vlog2.pop %v94
    %v98 = vmul.f32 %v97, 0.6931472
    %v99 = vmul.f32 %v96, %v96
    %v100 = vmul.f32 %v98, %v98
    %v101 = vld [vmem:[#allocation7] sm:$0xff]
    %v102 = vadd.f32 %v99, %v100
    %v103 = vadd.f32 %v101, %v102
    %104 = vst [vmem:[#allocation7] sm:$0xff] %v103
    %v105 = vld [vmem:[#allocation8] sm:$0xff]
    %v106 = vadd.f32 %v89, %v90
    %v107 = vadd.f32 %v105, %v106
    %108 = vst [vmem:[#allocation8] sm:$0xff] %v107
    // Predicated region
    $region22: #{tpu_custom_call.1} parent=1 // pred_check
      _
    $region23: #{tpu_custom_call.1} parent=1 // pred_check_branch
      %110 = sbr.rel (0) target = $region25
    $region24: #{tpu_custom_call.1} parent=1 // pred_region
      %s112 = ssub.s32 128, 128
      %113 = vsyncadd [#allocation4], %s112
      %s115 = sshll.u32 [#allocation7], 4
      %s116 = int_to_ptr.vmem [resolvable:$true] %s115
      %118 = dma.vmem_to_hbm [thread:$0]  %s116, 128, %s2, [#allocation4]
    $region25: #{tpu_custom_call.1} parent=1 // pred_fallthru
      _
    // Predicated region
    $region26: #{tpu_custom_call.1} parent=1 // pred_check
      _
    $region27: #{tpu_custom_call.1} parent=1 // pred_check_branch
      %120 = sbr.rel (0) target = $region29
    $region28: #{tpu_custom_call.1} parent=1 // pred_region
      %s122 = ssub.s32 128, 128
      %123 = vsyncadd [#allocation9], %s122
      %s125 = sshll.u32 [#allocation8], 4
      %s126 = int_to_ptr.vmem [resolvable:$true] %s125
      %128 = dma.vmem_to_hbm [thread:$0]  %s126, 128, %s3, [#allocation9]
    $region29: #{tpu_custom_call.1} parent=1 // pred_fallthru
      _
    // Predicated region
    $region30: #{tpu_custom_call.1} parent=1 // pred_check
      _
    $region31: #{tpu_custom_call.1} parent=1 // pred_check_branch
      %130 = sbr.rel (0) target = $region33
    $region32: #{tpu_custom_call.1} parent=1 // pred_region
      %131 = dma.done [#allocation4], 128
    $region33: #{tpu_custom_call.1} parent=1 // pred_fallthru
      _
    // Predicated region
    $region34: #{tpu_custom_call.1} parent=1 // pred_check
      _
    $region35: #{tpu_custom_call.1} parent=1 // pred_check_branch
      %133 = sbr.rel (0) target = $region37
    $region36: #{tpu_custom_call.1} parent=1 // pred_region
      %134 = dma.done [#allocation9], 128
    $region37: #{tpu_custom_call.1} parent=1 // pred_fallthru
      _
    %135 = vsyncpa [#allocation3], 1
    %136 = vsyncpa [#allocation6], 1
    %137 = vsyncpa [#allocation4], 1
    %138 = vsyncpa [#allocation9], 1

</llo_original>
